<compile_context>
chip_gen: v6e
topology: v6e:2x2x1
jax: 0.10.0
libtpu: 0.0.40
codegen_flags: <defaults>
</compile_context>

<pallas_src>
import jax
import jax.numpy as jnp
import numpy as np
from jax import lax
from jax.experimental import pallas as pl
from jax.experimental.pallas import tpu as pltpu


def _make_fagc_kernel(H, W, Cin, Cout):
    PT = 3                    # top/bottom halo rows (>= 3 keeps 5x5 flat shifts in-bounds)
    PL = 4                    # left/right halo cols (>= 2; 4 makes N a multiple of 128 for W=16)
    Wp = W + 2 * PL           # padded row stride (flat/lane stride)        (24)
    Hp = H + 2 * PT
    L = Hp * Wp               # flattened padded spatial length             (528)
    N = H * Wp                # flattened output-window length              (384 = 3*128)
    WS = PT * Wp              # flat offset of the first data row           (72)

    C2 = 2 * Cin              # stacked (x1 | x2) channel rows              (8)
    K1 = 9 * C2               # stage-1 im2col rows                         (72)
    NP3 = 5 * 3               # stage-3 tap pairs (kw padded 5 -> 6, 2 taps/pair)
    K2 = NP3 * 2 * Cout       # stage-3 im2col rows                         (120)
    KP = max(K1, K2)          # shared im2col scratch rows

    def kernel(xs_ref, w1_ref, w5_ref, mask_ref, out_ref, p_ref, mid_ref):
        xs = xs_ref[0]                                   # (2*Cin, L) f32, flat padded

        # ---- stage 1: gray_conv(x1) + dvs_conv(x2) fused into ONE f32 matmul.
        # im2col row order = (kh, kw, [x1 ch | x2 ch]); x1/x2 are pre-stacked on
        # channels, so each tap is a single 8-sublane-aligned full-tile store.
        t = 0
        for kh in range(3):
            for kw in range(3):
                s = WS + (kh - 1) * Wp + (kw - 1)
                p_ref[t * C2:(t + 1) * C2, :] = xs[:, s:s + N]
                t += 1
        a = jnp.dot(w1_ref[...], p_ref[0:K1, :],
                    preferred_element_type=jnp.float32)   # (Cout, N) f32

        # ---- stage 2: embed the masked conv sum into a zero-halo flat canvas,
        # twice: rows [0,Cout) = mid; rows [Cout,2*Cout) = mid shifted +1 column.
        # One 8-row slice of mid_ref then yields two adjacent 5x5 taps at once.
        # (mask kills the junk columns between padded rows; mid is tiny, so a
        #  full re-zero each step is a handful of stores and megacore-safe.)
        am = a * mask_ref[...]
        mid_ref[...] = jnp.zeros_like(mid_ref)
        mid_ref[0:Cout, WS:WS + N] = am
        mid_ref[Cout:2 * Cout, WS - 1:WS - 1 + N] = am

        # ---- stage 3: 5x5 att_conv as ONE f32 matmul; taps written in pairs.
        # kw pairs: (0,1) (2,3) (4,phantom-5); the phantom's weight columns are 0.
        mid = mid_ref[...]
        t = 0
        for kh in range(5):
            for kwp in range(3):
                s = WS + (kh - 2) * Wp + (2 * kwp - 2)
                p_ref[t * 2 * Cout:(t + 1) * 2 * Cout, :] = mid[:, s:s + N]
                t += 1
        z = jnp.dot(w5_ref[...], p_ref[0:K2, :],
                    preferred_element_type=jnp.float32)   # (Cout, N) f32

        # ---- stage 4: sigmoid gate (EUP) * residual (VPU), all f32.
        res = xs[0:Cin, WS:WS + N]                         # original x1, same layout
        out_ref[0] = (res * jax.nn.sigmoid(z)).astype(out_ref.dtype)

    dims = dict(PT=PT, PL=PL, Wp=Wp, Hp=Hp, L=L, N=N, WS=WS,
                C2=C2, K1=K1, K2=K2, KP=KP)
    return kernel, dims


@jax.jit
def fagc_pallas(x1, x2, w3g, w3d, w5):
    """FAGC forward. x1, x2: (B, C, H, W) f32 (NCHW); weights OIHW (PyTorch)."""
    B, Cin, H, W = x1.shape
    Cout = w3g.shape[0]
    assert Cin == Cout, "FAGC residual multiply requires in_planes == out_planes"

    kernel, d = _make_fagc_kernel(H, W, Cin, Cout)
    PT, PL, Wp, L, N = d["PT"], d["PL"], d["Wp"], d["L"], d["N"]
    C2, K1, K2, KP = d["C2"], d["K1"], d["K2"], d["KP"]

    # Stack x1|x2 on channels, then pad + flatten once in XLA so the spatial
    # axis sits densely on lanes (data at rows PT..PT+H-1, cols PL..PL+W-1).
    xs = jnp.concatenate([x1, x2], axis=1)                       # (B, 2*Cin, H, W)
    xs = jnp.pad(xs, ((0, 0), (0, 0), (PT, PT), (PL, PL))).reshape(B, C2, L)

    # Stage-1 fused weights (f32), K order = (kh, kw, source, cin).
    w1m = jnp.stack([w3g, w3d], axis=0)                          # (2, O, C, 3, 3)
    w1m = jnp.transpose(w1m, (1, 3, 4, 0, 2)).reshape(Cout, K1).astype(jnp.float32)

    # Stage-3 weights (f32): pad kw 5 -> 6 (phantom tap = zero weights) so taps
    # pair cleanly; K order = (kh, kw_pair, half, c).
    w5p = jnp.pad(w5, ((0, 0), (0, 0), (0, 0), (0, 1)))          # (O, C, 5, 6)
    w5m = jnp.transpose(w5p, (0, 2, 3, 1)).reshape(Cout, K2).astype(jnp.float32)

    # 0/1 mask of the valid columns inside each padded row (zeroes junk cols).
    # Kept as a tiny (1, N) constant input (proven lowering path) rather than
    # an in-kernel integer-mod iota.
    col = np.arange(N) % Wp
    mask = jnp.asarray(((col >= PL) & (col < PL + W)).astype(np.float32)).reshape(1, N)

    out_flat = pl.pallas_call(
        kernel,
        out_shape=jax.ShapeDtypeStruct((B, Cout, N), jnp.float32),
        grid=(B,),
        in_specs=[
            pl.BlockSpec((1, C2, L), lambda b: (b, 0, 0)),
            pl.BlockSpec((Cout, K1), lambda b: (0, 0)),
            pl.BlockSpec((Cout, K2), lambda b: (0, 0)),
            pl.BlockSpec((1, N), lambda b: (0, 0)),
        ],
        out_specs=pl.BlockSpec((1, Cout, N), lambda b: (b, 0, 0)),
        scratch_shapes=[
            pltpu.VMEM((KP, N), jnp.float32),        # shared im2col (stage 1 & 3)
            pltpu.VMEM((2 * Cout, L), jnp.float32),  # zero-halo intermediate (x2 copies)
        ],
        compiler_params=pltpu.CompilerParams(
            dimension_semantics=("parallel",)),
    )(xs, w1m, w5m, mask)

    # Drop the junk columns per padded row; result is already NCHW.
    return out_flat.reshape(B, Cout, H, Wp)[:, :, :, PL:PL + W]


def _fagc_reference(x1, x2, w3g, w3d, w5):
    """Pure-JAX reference mirroring the PyTorch module exactly (NCHW/OIHW)."""
    def conv(x, w, p):
        return lax.conv_general_dilated(
            x, w, window_strides=(1, 1), padding=[(p, p), (p, p)],
            dimension_numbers=("NCHW", "OIHW", "NCHW"))

    a = conv(x1, w3g, 1) + conv(x2, w3d, 1)
    return x1 * jax.nn.sigmoid(conv(a, w5, 2))


if __name__ == "__main__":
    B, C, H, W = 2, 4, 16, 16          # in_planes = out_planes = 4
    key = jax.random.PRNGKey(0)
    k1, k2, k3, k4, k5 = jax.random.split(key, 5)

    x1 = jax.random.normal(k1, (B, C, H, W), jnp.float32)
    x2 = jax.random.normal(k2, (B, C, H, W), jnp.float32)

    # Deterministic synthetic weights in PyTorch Conv2d (OIHW) layout.
    w3g = jax.random.normal(k3, (C, C, 3, 3), jnp.float32) * 0.1
    w3d = jax.random.normal(k4, (C, C, 3, 3), jnp.float32) * 0.1
    w5 = jax.random.normal(k5, (C, C, 5, 5), jnp.float32) * 0.05

    out = jax.block_until_ready(fagc_pallas(x1, x2, w3g, w3d, w5))
    ref = jax.block_until_ready(_fagc_reference(x1, x2, w3g, w3d, w5))

    assert out.shape == (B, C, H, W)
    # All-f32 path (default TPU matmul precision on both sides) -> tight parity.
    assert np.allclose(np.asarray(out), np.asarray(ref), atol=5e-3, rtol=5e-3)

    print("KERNEL_OK")
</pallas_src>

<mosaic_0001>
module attributes {stable_mosaic.version = 11 : i64} {
  func.func @kernel(%arg0: i32, %arg1: memref<1x8x528xf32, #tpu.memory_space<vmem>>, %arg2: memref<4x72xf32, #tpu.memory_space<vmem>>, %arg3: memref<4x120xf32, #tpu.memory_space<vmem>>, %arg4: memref<1x384xf32, #tpu.memory_space<vmem>>, %arg5: memref<1x4x384xf32, #tpu.memory_space<vmem>>, %arg6: memref<120x384xf32, #tpu.memory_space<vmem>>, %arg7: memref<8x528xf32, #tpu.memory_space<vmem>>) attributes {dimension_semantics = [#tpu.dimension_semantics<parallel>], iteration_bounds = array<i64: 2>, scalar_prefetch = 0 : i64, scratch_operands = 2 : i64, tpu.core_type = #tpu.core_type<tc>, window_params = [{transform_indices = @transform_0, window_bounds = array<i64: 1, 8, 528>}, {pipeline_mode = #tpu.pipeline_mode<synchronous>, transform_indices = @transform_1, window_bounds = array<i64: 4, 72>}, {pipeline_mode = #tpu.pipeline_mode<synchronous>, transform_indices = @transform_2, window_bounds = array<i64: 4, 120>}, {pipeline_mode = #tpu.pipeline_mode<synchronous>, transform_indices = @transform_3, window_bounds = array<i64: 1, 384>}, {transform_indices = @transform_4, window_bounds = array<i64: 1, 4, 384>}]} {
    %c0 = arith.constant 0 : index
    %c0_0 = arith.constant 0 : index
    %c0_1 = arith.constant 0 : index
    %0 = vector.load %arg1[%c0, %c0_0, %c0_1] : memref<1x8x528xf32, #tpu.memory_space<vmem>>, vector<1x8x528xf32>
    %1 = vector.shape_cast %0 : vector<1x8x528xf32> to vector<8x528xf32>
    %2 = vector.extract_strided_slice %1 {offsets = [0, 47], sizes = [8, 384], strides = [1, 1]} : vector<8x528xf32> to vector<8x384xf32>
    %c0_2 = arith.constant 0 : index
    %c0_3 = arith.constant 0 : index
    %3 = vector.load %arg6[%c0_2, %c0_3] : memref<120x384xf32, #tpu.memory_space<vmem>>, vector<8x384xf32>
    tpu.vector_store %arg6[%c0_2, %c0_3], %2 {strides = array<i32>} : memref<120x384xf32, #tpu.memory_space<vmem>>, vector<8x384xf32>,
    %4 = vector.extract_strided_slice %1 {offsets = [0, 48], sizes = [8, 384], strides = [1, 1]} : vector<8x528xf32> to vector<8x384xf32>
    %c8 = arith.constant 8 : index
    %c0_4 = arith.constant 0 : index
    %5 = vector.load %arg6[%c8, %c0_4] : memref<120x384xf32, #tpu.memory_space<vmem>>, vector<8x384xf32>
    tpu.vector_store %arg6[%c8, %c0_4], %4 {strides = array<i32>} : memref<120x384xf32, #tpu.memory_space<vmem>>, vector<8x384xf32>,
    %6 = vector.extract_strided_slice %1 {offsets = [0, 49], sizes = [8, 384], strides = [1, 1]} : vector<8x528xf32> to vector<8x384xf32>
    %c16 = arith.constant 16 : index
    %c0_5 = arith.constant 0 : index
    %7 = vector.load %arg6[%c16, %c0_5] : memref<120x384xf32, #tpu.memory_space<vmem>>, vector<8x384xf32>
    tpu.vector_store %arg6[%c16, %c0_5], %6 {strides = array<i32>} : memref<120x384xf32, #tpu.memory_space<vmem>>, vector<8x384xf32>,
    %8 = vector.extract_strided_slice %1 {offsets = [0, 71], sizes = [8, 384], strides = [1, 1]} : vector<8x528xf32> to vector<8x384xf32>
    %c24 = arith.constant 24 : index
    %c0_6 = arith.constant 0 : index
    %9 = vector.load %arg6[%c24, %c0_6] : memref<120x384xf32, #tpu.memory_space<vmem>>, vector<8x384xf32>
    tpu.vector_store %arg6[%c24, %c0_6], %8 {strides = array<i32>} : memref<120x384xf32, #tpu.memory_space<vmem>>, vector<8x384xf32>,
    %10 = vector.extract_strided_slice %1 {offsets = [0, 72], sizes = [8, 384], strides = [1, 1]} : vector<8x528xf32> to vector<8x384xf32>
    %c32 = arith.constant 32 : index
    %c0_7 = arith.constant 0 : index
    %11 = vector.load %arg6[%c32, %c0_7] : memref<120x384xf32, #tpu.memory_space<vmem>>, vector<8x384xf32>
    tpu.vector_store %arg6[%c32, %c0_7], %10 {strides = array<i32>} : memref<120x384xf32, #tpu.memory_space<vmem>>, vector<8x384xf32>,
    %12 = vector.extract_strided_slice %1 {offsets = [0, 73], sizes = [8, 384], strides = [1, 1]} : vector<8x528xf32> to vector<8x384xf32>
    %c40 = arith.constant 40 : index
    %c0_8 = arith.constant 0 : index
    %13 = vector.load %arg6[%c40, %c0_8] : memref<120x384xf32, #tpu.memory_space<vmem>>, vector<8x384xf32>
    tpu.vector_store %arg6[%c40, %c0_8], %12 {strides = array<i32>} : memref<120x384xf32, #tpu.memory_space<vmem>>, vector<8x384xf32>,
    %14 = vector.extract_strided_slice %1 {offsets = [0, 95], sizes = [8, 384], strides = [1, 1]} : vector<8x528xf32> to vector<8x384xf32>
    %c48 = arith.constant 48 : index
    %c0_9 = arith.constant 0 : index
    %15 = vector.load %arg6[%c48, %c0_9] : memref<120x384xf32, #tpu.memory_space<vmem>>, vector<8x384xf32>
    tpu.vector_store %arg6[%c48, %c0_9], %14 {strides = array<i32>} : memref<120x384xf32, #tpu.memory_space<vmem>>, vector<8x384xf32>,
    %16 = vector.extract_strided_slice %1 {offsets = [0, 96], sizes = [8, 384], strides = [1, 1]} : vector<8x528xf32> to vector<8x384xf32>
    %c56 = arith.constant 56 : index
    %c0_10 = arith.constant 0 : index
    %17 = vector.load %arg6[%c56, %c0_10] : memref<120x384xf32, #tpu.memory_space<vmem>>, vector<8x384xf32>
    tpu.vector_store %arg6[%c56, %c0_10], %16 {strides = array<i32>} : memref<120x384xf32, #tpu.memory_space<vmem>>, vector<8x384xf32>,
    %18 = vector.extract_strided_slice %1 {offsets = [0, 97], sizes = [8, 384], strides = [1, 1]} : vector<8x528xf32> to vector<8x384xf32>
    %c64 = arith.constant 64 : index
    %c0_11 = arith.constant 0 : index
    %19 = vector.load %arg6[%c64, %c0_11] : memref<120x384xf32, #tpu.memory_space<vmem>>, vector<8x384xf32>
    tpu.vector_store %arg6[%c64, %c0_11], %18 {strides = array<i32>} : memref<120x384xf32, #tpu.memory_space<vmem>>, vector<8x384xf32>,
    %c0_12 = arith.constant 0 : index
    %c0_13 = arith.constant 0 : index
    %20 = vector.load %arg2[%c0_12, %c0_13] : memref<4x72xf32, #tpu.memory_space<vmem>>, vector<4x72xf32>
    %c0_14 = arith.constant 0 : index
    %c0_15 = arith.constant 0 : index
    %21 = vector.load %arg6[%c0_14, %c0_15] : memref<120x384xf32, #tpu.memory_space<vmem>>, vector<72x384xf32>
    %cst = arith.constant dense<0.000000e+00> : vector<4x384xf32>
    %22 = tpu.matmul %20, %21, %cst {dimension_numbers = #tpu.dot_dimension_numbers<[1], [0], [0], [1], [0, 0, 1, 1], [], []>} : vector<4x72xf32>, vector<72x384xf32>, vector<4x384xf32> -> vector<4x384xf32>
    %c0_16 = arith.constant 0 : index
    %c0_17 = arith.constant 0 : index
    %23 = vector.load %arg4[%c0_16, %c0_17] : memref<1x384xf32, #tpu.memory_space<vmem>>, vector<1x384xf32>
    %24 = vector.broadcast %23 : vector<1x384xf32> to vector<4x384xf32>
    %25 = arith.mulf %22, %24 : vector<4x384xf32>
    %cst_18 = arith.constant 0.000000e+00 : f32
    %26 = vector.broadcast %cst_18 : f32 to vector<8x528xf32>
    %c0_19 = arith.constant 0 : index
    %c0_20 = arith.constant 0 : index
    %27 = vector.load %arg7[%c0_19, %c0_20] : memref<8x528xf32, #tpu.memory_space<vmem>>, vector<8x528xf32>
    tpu.vector_store %arg7[%c0_19, %c0_20], %26 {strides = array<i32>} : memref<8x528xf32, #tpu.memory_space<vmem>>, vector<8x528xf32>,
    %c0_21 = arith.constant 0 : index
    %c72 = arith.constant 72 : index
    %28 = vector.load %arg7[%c0_21, %c72] : memref<8x528xf32, #tpu.memory_space<vmem>>, vector<4x384xf32>
    tpu.vector_store %arg7[%c0_21, %c72], %25 {strides = array<i32>} : memref<8x528xf32, #tpu.memory_space<vmem>>, vector<4x384xf32>,
    %c4 = arith.constant 4 : index
    %c71 = arith.constant 71 : index
    %29 = vector.load %arg7[%c4, %c71] : memref<8x528xf32, #tpu.memory_space<vmem>>, vector<4x384xf32>
    tpu.vector_store %arg7[%c4, %c71], %25 {strides = array<i32>} : memref<8x528xf32, #tpu.memory_space<vmem>>, vector<4x384xf32>,
    %c0_22 = arith.constant 0 : index
    %c0_23 = arith.constant 0 : index
    %30 = vector.load %arg7[%c0_22, %c0_23] : memref<8x528xf32, #tpu.memory_space<vmem>>, vector<8x528xf32>
    %31 = vector.extract_strided_slice %30 {offsets = [0, 22], sizes = [8, 384], strides = [1, 1]} : vector<8x528xf32> to vector<8x384xf32>
    %c0_24 = arith.constant 0 : index
    %c0_25 = arith.constant 0 : index
    %32 = vector.load %arg6[%c0_24, %c0_25] : memref<120x384xf32, #tpu.memory_space<vmem>>, vector<8x384xf32>
    tpu.vector_store %arg6[%c0_24, %c0_25], %31 {strides = array<i32>} : memref<120x384xf32, #tpu.memory_space<vmem>>, vector<8x384xf32>,
    %33 = vector.extract_strided_slice %30 {offsets = [0, 24], sizes = [8, 384], strides = [1, 1]} : vector<8x528xf32> to vector<8x384xf32>
    %c8_26 = arith.constant 8 : index
    %c0_27 = arith.constant 0 : index
    %34 = vector.load %arg6[%c8_26, %c0_27] : memref<120x384xf32, #tpu.memory_space<vmem>>, vector<8x384xf32>
    tpu.vector_store %arg6[%c8_26, %c0_27], %33 {strides = array<i32>} : memref<120x384xf32, #tpu.memory_space<vmem>>, vector<8x384xf32>,
    %35 = vector.extract_strided_slice %30 {offsets = [0, 26], sizes = [8, 384], strides = [1, 1]} : vector<8x528xf32> to vector<8x384xf32>
    %c16_28 = arith.constant 16 : index
    %c0_29 = arith.constant 0 : index
    %36 = vector.load %arg6[%c16_28, %c0_29] : memref<120x384xf32, #tpu.memory_space<vmem>>, vector<8x384xf32>
    tpu.vector_store %arg6[%c16_28, %c0_29], %35 {strides = array<i32>} : memref<120x384xf32, #tpu.memory_space<vmem>>, vector<8x384xf32>,
    %37 = vector.extract_strided_slice %30 {offsets = [0, 46], sizes = [8, 384], strides = [1, 1]} : vector<8x528xf32> to vector<8x384xf32>
    %c24_30 = arith.constant 24 : index
    %c0_31 = arith.constant 0 : index
    %38 = vector.load %arg6[%c24_30, %c0_31] : memref<120x384xf32, #tpu.memory_space<vmem>>, vector<8x384xf32>
    tpu.vector_store %arg6[%c24_30, %c0_31], %37 {strides = array<i32>} : memref<120x384xf32, #tpu.memory_space<vmem>>, vector<8x384xf32>,
    %39 = vector.extract_strided_slice %30 {offsets = [0, 48], sizes = [8, 384], strides = [1, 1]} : vector<8x528xf32> to vector<8x384xf32>
    %c32_32 = arith.constant 32 : index
    %c0_33 = arith.constant 0 : index
    %40 = vector.load %arg6[%c32_32, %c0_33] : memref<120x384xf32, #tpu.memory_space<vmem>>, vector<8x384xf32>
    tpu.vector_store %arg6[%c32_32, %c0_33], %39 {strides = array<i32>} : memref<120x384xf32, #tpu.memory_space<vmem>>, vector<8x384xf32>,
    %41 = vector.extract_strided_slice %30 {offsets = [0, 50], sizes = [8, 384], strides = [1, 1]} : vector<8x528xf32> to vector<8x384xf32>
    %c40_34 = arith.constant 40 : index
    %c0_35 = arith.constant 0 : index
    %42 = vector.load %arg6[%c40_34, %c0_35] : memref<120x384xf32, #tpu.memory_space<vmem>>, vector<8x384xf32>
    tpu.vector_store %arg6[%c40_34, %c0_35], %41 {strides = array<i32>} : memref<120x384xf32, #tpu.memory_space<vmem>>, vector<8x384xf32>,
    %43 = vector.extract_strided_slice %30 {offsets = [0, 70], sizes = [8, 384], strides = [1, 1]} : vector<8x528xf32> to vector<8x384xf32>
    %c48_36 = arith.constant 48 : index
    %c0_37 = arith.constant 0 : index
    %44 = vector.load %arg6[%c48_36, %c0_37] : memref<120x384xf32, #tpu.memory_space<vmem>>, vector<8x384xf32>
    tpu.vector_store %arg6[%c48_36, %c0_37], %43 {strides = array<i32>} : memref<120x384xf32, #tpu.memory_space<vmem>>, vector<8x384xf32>,
    %45 = vector.extract_strided_slice %30 {offsets = [0, 72], sizes = [8, 384], strides = [1, 1]} : vector<8x528xf32> to vector<8x384xf32>
    %c56_38 = arith.constant 56 : index
    %c0_39 = arith.constant 0 : index
    %46 = vector.load %arg6[%c56_38, %c0_39] : memref<120x384xf32, #tpu.memory_space<vmem>>, vector<8x384xf32>
    tpu.vector_store %arg6[%c56_38, %c0_39], %45 {strides = array<i32>} : memref<120x384xf32, #tpu.memory_space<vmem>>, vector<8x384xf32>,
    %47 = vector.extract_strided_slice %30 {offsets = [0, 74], sizes = [8, 384], strides = [1, 1]} : vector<8x528xf32> to vector<8x384xf32>
    %c64_40 = arith.constant 64 : index
    %c0_41 = arith.constant 0 : index
    %48 = vector.load %arg6[%c64_40, %c0_41] : memref<120x384xf32, #tpu.memory_space<vmem>>, vector<8x384xf32>
    tpu.vector_store %arg6[%c64_40, %c0_41], %47 {strides = array<i32>} : memref<120x384xf32, #tpu.memory_space<vmem>>, vector<8x384xf32>,
    %49 = vector.extract_strided_slice %30 {offsets = [0, 94], sizes = [8, 384], strides = [1, 1]} : vector<8x528xf32> to vector<8x384xf32>
    %c72_42 = arith.constant 72 : index
    %c0_43 = arith.constant 0 : index
    %50 = vector.load %arg6[%c72_42, %c0_43] : memref<120x384xf32, #tpu.memory_space<vmem>>, vector<8x384xf32>
    tpu.vector_store %arg6[%c72_42, %c0_43], %49 {strides = array<i32>} : memref<120x384xf32, #tpu.memory_space<vmem>>, vector<8x384xf32>,
    %51 = vector.extract_strided_slice %30 {offsets = [0, 96], sizes = [8, 384], strides = [1, 1]} : vector<8x528xf32> to vector<8x384xf32>
    %c80 = arith.constant 80 : index
    %c0_44 = arith.constant 0 : index
    %52 = vector.load %arg6[%c80, %c0_44] : memref<120x384xf32, #tpu.memory_space<vmem>>, vector<8x384xf32>
    tpu.vector_store %arg6[%c80, %c0_44], %51 {strides = array<i32>} : memref<120x384xf32, #tpu.memory_space<vmem>>, vector<8x384xf32>,
    %53 = vector.extract_strided_slice %30 {offsets = [0, 98], sizes = [8, 384], strides = [1, 1]} : vector<8x528xf32> to vector<8x384xf32>
    %c88 = arith.constant 88 : index
    %c0_45 = arith.constant 0 : index
    %54 = vector.load %arg6[%c88, %c0_45] : memref<120x384xf32, #tpu.memory_space<vmem>>, vector<8x384xf32>
    tpu.vector_store %arg6[%c88, %c0_45], %53 {strides = array<i32>} : memref<120x384xf32, #tpu.memory_space<vmem>>, vector<8x384xf32>,
    %55 = vector.extract_strided_slice %30 {offsets = [0, 118], sizes = [8, 384], strides = [1, 1]} : vector<8x528xf32> to vector<8x384xf32>
    %c96 = arith.constant 96 : index
    %c0_46 = arith.constant 0 : index
    %56 = vector.load %arg6[%c96, %c0_46] : memref<120x384xf32, #tpu.memory_space<vmem>>, vector<8x384xf32>
    tpu.vector_store %arg6[%c96, %c0_46], %55 {strides = array<i32>} : memref<120x384xf32, #tpu.memory_space<vmem>>, vector<8x384xf32>,
    %57 = vector.extract_strided_slice %30 {offsets = [0, 120], sizes = [8, 384], strides = [1, 1]} : vector<8x528xf32> to vector<8x384xf32>
    %c104 = arith.constant 104 : index
    %c0_47 = arith.constant 0 : index
    %58 = vector.load %arg6[%c104, %c0_47] : memref<120x384xf32, #tpu.memory_space<vmem>>, vector<8x384xf32>
    tpu.vector_store %arg6[%c104, %c0_47], %57 {strides = array<i32>} : memref<120x384xf32, #tpu.memory_space<vmem>>, vector<8x384xf32>,
    %59 = vector.extract_strided_slice %30 {offsets = [0, 122], sizes = [8, 384], strides = [1, 1]} : vector<8x528xf32> to vector<8x384xf32>
    %c112 = arith.constant 112 : index
    %c0_48 = arith.constant 0 : index
    %60 = vector.load %arg6[%c112, %c0_48] : memref<120x384xf32, #tpu.memory_space<vmem>>, vector<8x384xf32>
    tpu.vector_store %arg6[%c112, %c0_48], %59 {strides = array<i32>} : memref<120x384xf32, #tpu.memory_space<vmem>>, vector<8x384xf32>,
    %c0_49 = arith.constant 0 : index
    %c0_50 = arith.constant 0 : index
    %61 = vector.load %arg3[%c0_49, %c0_50] : memref<4x120xf32, #tpu.memory_space<vmem>>, vector<4x120xf32>
    %c0_51 = arith.constant 0 : index
    %c0_52 = arith.constant 0 : index
    %62 = vector.load %arg6[%c0_51, %c0_52] : memref<120x384xf32, #tpu.memory_space<vmem>>, vector<120x384xf32>
    %cst_53 = arith.constant dense<0.000000e+00> : vector<4x384xf32>
    %63 = tpu.matmul %61, %62, %cst_53 {dimension_numbers = #tpu.dot_dimension_numbers<[1], [0], [0], [1], [0, 0, 1, 1], [], []>} : vector<4x120xf32>, vector<120x384xf32>, vector<4x384xf32> -> vector<4x384xf32>
    %64 = vector.extract_strided_slice %1 {offsets = [0, 72], sizes = [4, 384], strides = [1, 1]} : vector<8x528xf32> to vector<4x384xf32>
    %65 = arith.negf %63 : vector<4x384xf32>
    %66 = math.exp %65 : vector<4x384xf32>
    %cst_54 = arith.constant 1.000000e+00 : f32
    %67 = vector.broadcast %cst_54 : f32 to vector<4x384xf32>
    %68 = arith.addf %67, %66 : vector<4x384xf32>
    %69 = arith.divf %67, %68 : vector<4x384xf32>
    %70 = arith.mulf %64, %69 : vector<4x384xf32>
    %c0_55 = arith.constant 0 : index
    %c0_56 = arith.constant 0 : index
    %c0_57 = arith.constant 0 : index
    %71 = vector.load %arg5[%c0_55, %c0_56, %c0_57] : memref<1x4x384xf32, #tpu.memory_space<vmem>>, vector<1x4x384xf32>
    %72 = vector.shape_cast %71 : vector<1x4x384xf32> to vector<4x384xf32>
    %73 = vector.shape_cast %70 : vector<4x384xf32> to vector<1x4x384xf32>
    tpu.vector_store %arg5[%c0_55, %c0_56, %c0_57], %73 {strides = array<i32>} : memref<1x4x384xf32, #tpu.memory_space<vmem>>, vector<1x4x384xf32>,
    return
  }
  func.func @transform_0(%arg0: i32) -> (i32, i32, i32) {
    %c0_i32 = arith.constant 0 : i32
    %c0_i32_0 = arith.constant 0 : i32
    %c0_i32_1 = arith.constant 0 : i32
    return %arg0, %c0_i32, %c0_i32_0 : i32, i32, i32
  }
  func.func @transform_1(%arg0: i32) -> (i32, i32) {
    %c0_i32 = arith.constant 0 : i32
    %c0_i32_0 = arith.constant 0 : i32
    %c0_i32_1 = arith.constant 0 : i32
    return %c0_i32, %c0_i32_0 : i32, i32
  }
  func.func @transform_2(%arg0: i32) -> (i32, i32) {
    %c0_i32 = arith.constant 0 : i32
    %c0_i32_0 = arith.constant 0 : i32
    %c0_i32_1 = arith.constant 0 : i32
    return %c0_i32, %c0_i32_0 : i32, i32
  }
  func.func @transform_3(%arg0: i32) -> (i32, i32) {
    %c0_i32 = arith.constant 0 : i32
    %c0_i32_0 = arith.constant 0 : i32
    %c0_i32_1 = arith.constant 0 : i32
    return %c0_i32, %c0_i32_0 : i32, i32
  }
  func.func @transform_4(%arg0: i32) -> (i32, i32, i32) {
    %c0_i32 = arith.constant 0 : i32
    %c0_i32_0 = arith.constant 0 : i32
    %c0_i32_1 = arith.constant 0 : i32
    return %arg0, %c0_i32, %c0_i32_0 : i32, i32, i32
  }
}

</mosaic_0001>

<llo_original>
// kernel: fagc_pallas.1
$region0: #{fagc_pallas.1}
  #allocation0 [shape = 'u32[]', space=smem, size = 0x4, offset = 0x4, fixed_abs, tag = 'smem constant byte address 0x4 - core index']
  #allocation1 [shape = 'u32[144,128]{1,0:T(1,128)}', space=vmem, size = 0x12000, scoped, tag = 'internal scratch']
  #allocation2 [shape = 'f32[120,384]{1,0:T(8,128)}', space=vmem, size = 0x2d000, scoped, tag = 'scratch operand']
  #allocation3 [shape = 'f32[8,528]{1,0:T(8,128)}', space=vmem, size = 0x5000, scoped, tag = 'scratch operand']
  %s0 = inlined_call_operand.vmem [shape: f32[2,8,528], index: 0, kind: input, shape index: {}]
  %s1 = inlined_call_operand.vmem [shape: f32[4,72], index: 1, kind: input, shape index: {}]
  %s2 = inlined_call_operand.vmem [shape: f32[4,120], index: 2, kind: input, shape index: {}]
  %s3 = inlined_call_operand.vmem [shape: f32[1,384], index: 3, kind: input, shape index: {}]
  %s4 = inlined_call_operand.vmem [shape: f32[2,4,384], index: 4, kind: output, shape index: {}]
  %s5 = sld [smem:[#allocation0]]
  $region49: #{fagc_pallas.1} parent=0
    _
  %s7 = ssub.s32 1, %s5
  %s8 = scalar_select 0, %s7, %s5
  loop: start=0, step=1, limit=4
  $region2: #{fagc_pallas.1} parent=0 // loop_pre_header
    _
  $region3: #{fagc_pallas.1} parent=0 // loop_header
    %s10 = sphi 0, %s14
    %p11 = scmp.ge.s32.totalorder %s10, 4
    %s20 = sphi 0, %s22
    %s23 = sphi 0, %s20
    %s24 = sphi 0, %s23
    %s40 = sphi 0, %s24
    %s44 = sphi 0, %s44
    %s46 = sphi 0, %s44
    %s47 = sphi 0, %s46
    %s61 = sphi 0, %s47
    %s65 = sphi 0, %s65
    %s67 = sphi 0, %s65
    %s68 = sphi 0, %s67
    %s82 = sphi 0, %s68
    %s86 = sphi 0, %s86
    %s88 = sphi 0, %s86
    %s89 = sphi 0, %s88
    %s103 = sphi 0, %s89
    %s109 = sphi 0, %s111
    %s112 = sphi 0, %s109
    %s113 = sphi 0, %s112
    %s129 = sphi 0, %s113
  $region4: #{fagc_pallas.1} parent=0 // loop_header_branch
    %13 = sbr.rel (%p11) target = $region8
  $region5: #{fagc_pallas.1} parent=0 // loop_body
    %s15 = ssub.s32 %s10, 1
    %s16 = ssub.s32 %s10, 2
    %s17 = sadd.s32 %s10, 1
    %s18 = ssub.s32 %s10, %s17
    %p19 = scmp.eq.s32.totalorder %s18, 0
    %s21 = sadd.s32 %s20, 1
    %s22 = scalar_select %p19, %s20, %s21
    %p25 = pneg %p19
    %p26 = scmp.eq.s32.totalorder %s10, 1
    %p27 = por %p25, %p26
    %p28 = scmp.ne.s32.totalorder %s20, %s23
    %p29 = scmp.eq.s32.totalorder %s10, 0
    %p30 = por %p28, %p29
    %p31 = scmp.ne.s32.totalorder %s20, %s23
    %p32 = scmp.eq.s32.totalorder %s15, 1
    %p33 = por %p31, %p32
    %p34 = scmp.ne.s32.totalorder %s23, %s24
    %p35 = scmp.eq.s32.totalorder %s15, 0
    %p36 = por %p34, %p35
    %p37 = scmp.ne.s32.totalorder %s23, %s24
    %p38 = scmp.eq.s32.totalorder %s16, 1
    %p39 = por %p37, %p38
    %p41 = scmp.ne.s32.totalorder %s24, %s40
    %p42 = scmp.eq.s32.totalorder %s16, 0
    %p43 = por %p41, %p42
    %s45 = sadd.s32 %s44, 1
    %p48 = scmp.eq.s32.totalorder %s10, 1
    %p49 = scmp.ne.s32.totalorder %s44, %s46
    %p50 = scmp.eq.s32.totalorder %s10, 0
    %p51 = por %p49, %p50
    %p52 = scmp.ne.s32.totalorder %s44, %s46
    %p53 = scmp.eq.s32.totalorder %s15, 1
    %p54 = por %p52, %p53
    %p55 = scmp.ne.s32.totalorder %s46, %s47
    %p56 = scmp.eq.s32.totalorder %s15, 0
    %p57 = por %p55, %p56
    %p58 = scmp.ne.s32.totalorder %s46, %s47
    %p59 = scmp.eq.s32.totalorder %s16, 1
    %p60 = por %p58, %p59
    %p62 = scmp.ne.s32.totalorder %s47, %s61
    %p63 = scmp.eq.s32.totalorder %s16, 0
    %p64 = por %p62, %p63
    %s66 = sadd.s32 %s65, 1
    %p69 = scmp.eq.s32.totalorder %s10, 1
    %p70 = scmp.ne.s32.totalorder %s65, %s67
    %p71 = scmp.eq.s32.totalorder %s10, 0
    %p72 = por %p70, %p71
    %p73 = scmp.ne.s32.totalorder %s65, %s67
    %p74 = scmp.eq.s32.totalorder %s15, 1
    %p75 = por %p73, %p74
    %p76 = scmp.ne.s32.totalorder %s67, %s68
    %p77 = scmp.eq.s32.totalorder %s15, 0
    %p78 = por %p76, %p77
    %p79 = scmp.ne.s32.totalorder %s67, %s68
    %p80 = scmp.eq.s32.totalorder %s16, 1
    %p81 = por %p79, %p80
    %p83 = scmp.ne.s32.totalorder %s68, %s82
    %p84 = scmp.eq.s32.totalorder %s16, 0
    %p85 = por %p83, %p84
    %s87 = sadd.s32 %s86, 1
    %p90 = scmp.eq.s32.totalorder %s10, 1
    %p91 = scmp.ne.s32.totalorder %s86, %s88
    %p92 = scmp.eq.s32.totalorder %s10, 0
    %p93 = por %p91, %p92
    %p94 = scmp.ne.s32.totalorder %s86, %s88
    %p95 = scmp.eq.s32.totalorder %s15, 1
    %p96 = por %p94, %p95
    %p97 = scmp.ne.s32.totalorder %s88, %s89
    %p98 = scmp.eq.s32.totalorder %s15, 0
    %p99 = por %p97, %p98
    %p100 = scmp.ne.s32.totalorder %s88, %s89
    %p101 = scmp.eq.s32.totalorder %s16, 1
    %p102 = por %p100, %p101
    %p104 = scmp.ne.s32.totalorder %s89, %s103
    %p105 = scmp.eq.s32.totalorder %s16, 0
    %p106 = por %p104, %p105
    %s107 = ssub.s32 %s10, %s17
    %p108 = scmp.eq.s32.totalorder %s107, 0
    %s110 = sadd.s32 %s109, 1
    %s111 = scalar_select %p108, %s109, %s110
    %p114 = pneg %p108
    %p115 = scmp.eq.s32.totalorder %s10, 1
    %p116 = por %p114, %p115
    %p117 = scmp.ne.s32.totalorder %s109, %s112
    %p118 = scmp.eq.s32.totalorder %s10, 0
    %p119 = por %p117, %p118
    %p120 = scmp.ne.s32.totalorder %s109, %s112
    %p121 = scmp.eq.s32.totalorder %s15, 1
    %p122 = por %p120, %p121
    %p123 = scmp.ne.s32.totalorder %s112, %s113
    %p124 = scmp.eq.s32.totalorder %s15, 0
    %p125 = por %p123, %p124
    %p126 = scmp.ne.s32.totalorder %s112, %s113
    %p127 = scmp.eq.s32.totalorder %s16, 1
    %p128 = por %p126, %p127
    %p130 = scmp.ne.s32.totalorder %s113, %s129
    %p131 = scmp.eq.s32.totalorder %s16, 0
    %p132 = por %p130, %p131
    %p133 = scmp.le.s32.totalorder 1, %s10
    %p134 = scmp.lt.s32.totalorder %s10, 3
    %p135 = pnand %p133, %p134
    %p136 = pneg %p135
    // Predicated region
    $region9: #{fagc_pallas.1} parent=5 // pred_check
      _
    $region10: #{fagc_pallas.1} parent=5 // pred_check_branch
      %138 = sbr.rel (%p135) target = $region12
    $region11: #{fagc_pallas.1} parent=5 // pred_region
      %s139 = ssub.s32 %s10, 1
      // Predicated region
      $region13: #{fagc_pallas.1} parent=11 // pred_check
        %p140 = pneg %p57
      $region14: #{fagc_pallas.1} parent=11 // pred_check_branch
        %142 = sbr.rel (%p140) target = $region16
      $region15: #{fagc_pallas.1} parent=11 // pred_region
        _
      $region16: #{fagc_pallas.1} parent=11 // pred_fallthru
        _
      // Predicated region
      $region17: #{fagc_pallas.1} parent=11 // pred_check
        %p143 = pneg %p78
      $region18: #{fagc_pallas.1} parent=11 // pred_check_branch
        %145 = sbr.rel (%p143) target = $region20
      $region19: #{fagc_pallas.1} parent=11 // pred_region
        _
      $region20: #{fagc_pallas.1} parent=11 // pred_fallthru
        _
      // Predicated region
      $region21: #{fagc_pallas.1} parent=11 // pred_check
        %p146 = pneg %p99
      $region22: #{fagc_pallas.1} parent=11 // pred_check_branch
        %148 = sbr.rel (%p146) target = $region24
      $region23: #{fagc_pallas.1} parent=11 // pred_region
        _
      $region24: #{fagc_pallas.1} parent=11 // pred_fallthru
        _
    $region12: #{fagc_pallas.1} parent=5 // pred_fallthru
      _
    %p149 = scmp.lt.s32.totalorder %s10, 2
    // Predicated region
    $region25: #{fagc_pallas.1} parent=5 // pred_check
      %p150 = pneg %p149
    $region26: #{fagc_pallas.1} parent=5 // pred_check_branch
      %152 = sbr.rel (%p150) target = $region28
    $region27: #{fagc_pallas.1} parent=5 // pred_region
      // Predicated region
      $region29: #{fagc_pallas.1} parent=27 // pred_check
        %p153 = pneg %p30
      $region30: #{fagc_pallas.1} parent=27 // pred_check_branch
        %155 = sbr.rel (%p153) target = $region32
      $region31: #{fagc_pallas.1} parent=27 // pred_region
        %p156 = scmp.lt.s32.totalorder %s10, 1
        %s157 = scalar_select %p156, %s10, 1
        %s158 = smul.addr %s157, 5
        %s159 = smul.addr %s158, 8
        %s160 = scalar_lea.vmem %s0, %s159
      $region32: #{fagc_pallas.1} parent=27 // pred_fallthru
        _
    $region28: #{fagc_pallas.1} parent=5 // pred_fallthru
      _
    %p161 = scmp.le.s32.totalorder 1, %s10
    %p162 = scmp.lt.s32.totalorder %s10, 3
    %p163 = pnand %p161, %p162
    %p164 = pneg %p163
    // Predicated region
    $region33: #{fagc_pallas.1} parent=5 // pred_check
      _
    $region34: #{fagc_pallas.1} parent=5 // pred_check_branch
      %166 = sbr.rel (%p163) target = $region36
    $region35: #{fagc_pallas.1} parent=5 // pred_region
      %s167 = ssub.s32 %s10, 1
      %p168 = scmp.lt.s32.totalorder %s15, 1
      %s169 = scalar_select %p168, %s15, 1
      %s170 = smul.addr %s169, 5
      %s171 = smul.addr %s170, 8
      %s172 = scalar_lea.vmem %s0, %s171
      %p173 = pneg %p36
      %p174 = pneg %p33
      %p175 = pneg %p57
      %p176 = pneg %p54
      %p177 = pneg %p78
      %p178 = pneg %p75
      %p179 = pneg %p99
      %p180 = pneg %p96
      %p181 = pneg %p125
      %p182 = pneg %p122
      %p183 = scmp.lt.s32.totalorder %s15, 1
      %s184 = scalar_select %p183, %s15, 1
      %s185 = smul.addr %s184, 3
      %s186 = smul.addr %s185, 4
      %s187 = scalar_lea.vmem %s4, %s186
      %p188 = scmp.lt.s32.totalorder %s15, 1
      %s189 = scalar_select %p188, %s15, 1
      %s190 = smul.addr %s189, 5
      %s191 = smul.addr %s190, 8
      %s192 = scalar_lea.vmem %s0, %s191
      %p193 = scmp.lt.s32.totalorder %s15, 1
      %s194 = scalar_select %p193, %s15, 1
      %s195 = smul.addr %s194, 3
      %s196 = smul.addr %s195, 4
      %s197 = scalar_lea.vmem %s4, %s196
      %v198 = vld [vmem:[%s192] sm:$0xff]
      %v199 = vld [vmem:[%s192 + $0x8] sm:$0xff]
      %v200 = vld [vmem:[%s192 + $0x10] sm:$0xff]
      %v201 = vld [vmem:[%s192 + $0x18] sm:$0xff]
      %206 = vrot.lane.b32.xlu0 %v198, 81
      %v207 = vpop.permute.xlu0 %206
      %208 = vrot.lane.b32.xlu0 %v199, 81
      %v209 = vpop.permute.xlu0 %208
      %210 = vrot.lane.b32.xlu0 %v200, 81
      %v211 = vpop.permute.xlu0 %210
      %212 = vrot.lane.b32.xlu0 %v201, 81
      %v213 = vpop.permute.xlu0 %212
      %vm214 = vcmask 662528
      %v215 = vsel %vm214, %v207, %v209
      %v216 = vsel %vm214, %v209, %v211
      %v217 = vsel %vm214, %v211, %v213
      %221 = vst [vmem:[#allocation2] sm:$0xff] %v215
      %222 = vst [vmem:[#allocation2 + $0x8] sm:$0xff] %v216
      %223 = vst [vmem:[#allocation2 + $0x10] sm:$0xff] %v217
      %224 = vrot.lane.b32.xlu0 %v198, 80
      %v225 = vpop.permute.xlu0 %224
      %226 = vrot.lane.b32.xlu0 %v199, 80
      %v227 = vpop.permute.xlu0 %226
      %228 = vrot.lane.b32.xlu0 %v200, 80
      %v229 = vpop.permute.xlu0 %228
      %230 = vrot.lane.b32.xlu0 %v201, 80
      %v231 = vpop.permute.xlu0 %230
      %vm232 = vcmask 654336
      %v233 = vsel %vm232, %v225, %v227
      %v234 = vsel %vm232, %v227, %v229
      %v235 = vsel %vm232, %v229, %v231
      %239 = vst [vmem:[#allocation2 + $0x18] sm:$0xff] %v233
      %240 = vst [vmem:[#allocation2 + $0x20] sm:$0xff] %v234
      %241 = vst [vmem:[#allocation2 + $0x28] sm:$0xff] %v235
      %242 = vrot.lane.b32.xlu0 %v198, 79
      %v243 = vpop.permute.xlu0 %242
      %244 = vrot.lane.b32.xlu0 %v199, 79
      %v245 = vpop.permute.xlu0 %244
      %246 = vrot.lane.b32.xlu0 %v200, 79
      %v247 = vpop.permute.xlu0 %246
      %248 = vrot.lane.b32.xlu0 %v201, 79
      %v249 = vpop.permute.xlu0 %248
      %vm250 = vcmask 646144
      %v251 = vsel %vm250, %v243, %v245
      %v252 = vsel %vm250, %v245, %v247
      %v253 = vsel %vm250, %v247, %v249
      %257 = vst [vmem:[#allocation2 + $0x30] sm:$0xff] %v251
      %258 = vst [vmem:[#allocation2 + $0x38] sm:$0xff] %v252
      %259 = vst [vmem:[#allocation2 + $0x40] sm:$0xff] %v253
      %260 = vrot.lane.b32.xlu0 %v198, 57
      %v261 = vpop.permute.xlu0 %260
      %262 = vrot.lane.b32.xlu0 %v199, 57
      %v263 = vpop.permute.xlu0 %262
      %264 = vrot.lane.b32.xlu0 %v200, 57
      %v265 = vpop.permute.xlu0 %264
      %266 = vrot.lane.b32.xlu0 %v201, 57
      %v267 = vpop.permute.xlu0 %266
      %vm268 = vcmask 465920
      %v269 = vsel %vm268, %v261, %v263
      %v270 = vsel %vm268, %v263, %v265
      %v271 = vsel %vm268, %v265, %v267
      %275 = vst [vmem:[#allocation2 + $0x48] sm:$0xff] %v269
      %276 = vst [vmem:[#allocation2 + $0x50] sm:$0xff] %v270
      %277 = vst [vmem:[#allocation2 + $0x58] sm:$0xff] %v271
      %278 = vrot.lane.b32.xlu0 %v198, 56
      %v279 = vpop.permute.xlu0 %278
      %280 = vrot.lane.b32.xlu0 %v199, 56
      %v281 = vpop.permute.xlu0 %280
      %282 = vrot.lane.b32.xlu0 %v200, 56
      %v283 = vpop.permute.xlu0 %282
      %284 = vrot.lane.b32.xlu0 %v201, 56
      %v285 = vpop.permute.xlu0 %284
      %vm286 = vcmask 457728
      %v287 = vsel %vm286, %v279, %v281
      %v288 = vsel %vm286, %v281, %v283
      %v289 = vsel %vm286, %v283, %v285
      %293 = vst [vmem:[#allocation2 + $0x60] sm:$0xff] %v287
      %294 = vst [vmem:[#allocation2 + $0x68] sm:$0xff] %v288
      %295 = vst [vmem:[#allocation2 + $0x70] sm:$0xff] %v289
      %296 = vrot.lane.b32.xlu0 %v198, 55
      %v297 = vpop.permute.xlu0 %296
      %298 = vrot.lane.b32.xlu0 %v199, 55
      %v299 = vpop.permute.xlu0 %298
      %300 = vrot.lane.b32.xlu0 %v200, 55
      %v301 = vpop.permute.xlu0 %300
      %302 = vrot.lane.b32.xlu0 %v201, 55
      %v303 = vpop.permute.xlu0 %302
      %vm304 = vcmask 449536
      %v305 = vsel %vm304, %v297, %v299
      %v306 = vsel %vm304, %v299, %v301
      %v307 = vsel %vm304, %v301, %v303
      %311 = vst [vmem:[#allocation2 + $0x78] sm:$0xff] %v305
      %312 = vst [vmem:[#allocation2 + $0x80] sm:$0xff] %v306
      %313 = vst [vmem:[#allocation2 + $0x88] sm:$0xff] %v307
      %314 = vrot.lane.b32.xlu0 %v198, 33
      %v315 = vpop.permute.xlu0 %314
      %316 = vrot.lane.b32.xlu0 %v199, 33
      %v317 = vpop.permute.xlu0 %316
      %318 = vrot.lane.b32.xlu0 %v200, 33
      %v319 = vpop.permute.xlu0 %318
      %320 = vrot.lane.b32.xlu0 %v201, 33
      %v321 = vpop.permute.xlu0 %320
      %vm322 = vcmask 269312
      %v323 = vsel %vm322, %v315, %v317
      %v324 = vsel %vm322, %v317, %v319
      %v325 = vsel %vm322, %v319, %v321
      %329 = vst [vmem:[#allocation2 + $0x90] sm:$0xff] %v323
      %330 = vst [vmem:[#allocation2 + $0x98] sm:$0xff] %v324
      %331 = vst [vmem:[#allocation2 + $0xa0] sm:$0xff] %v325
      %332 = vrot.lane.b32.xlu0 %v198, 32
      %v333 = vpop.permute.xlu0 %332
      %334 = vrot.lane.b32.xlu0 %v199, 32
      %v335 = vpop.permute.xlu0 %334
      %336 = vrot.lane.b32.xlu0 %v200, 32
      %v337 = vpop.permute.xlu0 %336
      %338 = vrot.lane.b32.xlu0 %v201, 32
      %v339 = vpop.permute.xlu0 %338
      %vm340 = vcmask 261120
      %v341 = vsel %vm340, %v333, %v335
      %v342 = vsel %vm340, %v335, %v337
      %v343 = vsel %vm340, %v337, %v339
      %347 = vst [vmem:[#allocation2 + $0xa8] sm:$0xff] %v341
      %348 = vst [vmem:[#allocation2 + $0xb0] sm:$0xff] %v342
      %349 = vst [vmem:[#allocation2 + $0xb8] sm:$0xff] %v343
      %350 = vrot.lane.b32.xlu0 %v198, 31
      %v351 = vpop.permute.xlu0 %350
      %352 = vrot.lane.b32.xlu0 %v199, 31
      %v353 = vpop.permute.xlu0 %352
      %354 = vrot.lane.b32.xlu0 %v200, 31
      %v355 = vpop.permute.xlu0 %354
      %356 = vrot.lane.b32.xlu0 %v201, 31
      %v357 = vpop.permute.xlu0 %356
      %vm358 = vcmask 252928
      %v359 = vsel %vm358, %v351, %v353
      %v360 = vsel %vm358, %v353, %v355
      %v361 = vsel %vm358, %v355, %v357
      %365 = vst [vmem:[#allocation2 + $0xc0] sm:$0xff] %v359
      %366 = vst [vmem:[#allocation2 + $0xc8] sm:$0xff] %v360
      %367 = vst [vmem:[#allocation2 + $0xd0] sm:$0xff] %v361
      %v368 = vld [vmem:[%s1] sm:$0xf]
      %v369 = vld [vmem:[#allocation2] sm:$0xff]
      %v370 = vld [vmem:[#allocation2 + $0x8] sm:$0xff]
      %v371 = vld [vmem:[#allocation2 + $0x10] sm:$0xff]
      %v372 = vld [vmem:[#allocation2 + $0x18] sm:$0xff]
      %v373 = vld [vmem:[#allocation2 + $0x20] sm:$0xff]
      %v374 = vld [vmem:[#allocation2 + $0x28] sm:$0xff]
      %v375 = vld [vmem:[#allocation2 + $0x30] sm:$0xff]
      %v376 = vld [vmem:[#allocation2 + $0x38] sm:$0xff]
      %v377 = vld [vmem:[#allocation2 + $0x40] sm:$0xff]
      %v378 = vld [vmem:[#allocation2 + $0x48] sm:$0xff]
      %v379 = vld [vmem:[#allocation2 + $0x50] sm:$0xff]
      %v380 = vld [vmem:[#allocation2 + $0x58] sm:$0xff]
      %v381 = vld [vmem:[#allocation2 + $0x60] sm:$0xff]
      %v382 = vld [vmem:[#allocation2 + $0x68] sm:$0xff]
      %v383 = vld [vmem:[#allocation2 + $0x70] sm:$0xff]
      %v384 = vld [vmem:[#allocation2 + $0x78] sm:$0xff]
      %v385 = vld [vmem:[#allocation2 + $0x80] sm:$0xff]
      %v386 = vld [vmem:[#allocation2 + $0x88] sm:$0xff]
      %v387 = vld [vmem:[#allocation2 + $0x90] sm:$0xff]
      %v388 = vld [vmem:[#allocation2 + $0x98] sm:$0xff]
      %v389 = vld [vmem:[#allocation2 + $0xa0] sm:$0xff]
      %v390 = vld [vmem:[#allocation2 + $0xa8] sm:$0xff]
      %v391 = vld [vmem:[#allocation2 + $0xb0] sm:$0xff]
      %v392 = vld [vmem:[#allocation2 + $0xb8] sm:$0xff]
      %v393 = vld [vmem:[#allocation2 + $0xc0] sm:$0xff]
      %v394 = vld [vmem:[#allocation2 + $0xc8] sm:$0xff]
      %v395 = vld [vmem:[#allocation2 + $0xd0] sm:$0xff]
      %vm396 = vcmask 588800
      %v398 = vsel %vm396, %v368, 0
      %400 = vmatprep.subr.mxu0 0.0
      %401 = vmatpush1.msra.mxu0 0.0
      %402 = vmatprep.subr.mxu0 0.0
      %403 = vmatpush1.msra.mxu0 0.0
      %404 = vmatprep.subr.mxu0 0.0
      %405 = vmatpush1.msra.mxu0 0.0
      %406 = vmatprep.subr.mxu0 0.0
      %407 = vmatpush1.msra.mxu0 0.0
      %408 = vmatprep.subr.mxu0 0.0
      %409 = vmatpush1.msra.mxu0 0.0
      %410 = vmatprep.subr.mxu0 0.0
      %411 = vmatpush1.msra.mxu0 0.0
      %412 = vmatprep.subr.mxu0 0.0
      %413 = vmatpush1.msra.mxu0 0.0
      %414 = vmatprep.subr.mxu0 %v394
      %415 = vmatpush1.msra.mxu0 %v393
      %416 = vmatprep.subr.mxu0 %v391
      %417 = vmatpush1.msra.mxu0 %v390
      %418 = vmatprep.subr.mxu0 %v388
      %419 = vmatpush1.msra.mxu0 %v387
      %420 = vmatprep.subr.mxu0 %v385
      %421 = vmatpush1.msra.mxu0 %v384
      %422 = vmatprep.subr.mxu0 %v382
      %423 = vmatpush1.msra.mxu0 %v381
      %424 = vmatprep.subr.mxu0 %v379
      %425 = vmatpush1.msra.mxu0 %v378
      %426 = vmatprep.subr.mxu0 %v376
      %427 = vmatpush1.msra.mxu0 %v375
      %428 = vmatprep.subr.mxu0 %v373
      %429 = vmatpush1.msra.mxu0 %v372
      %430 = vmatprep.subr.mxu0 %v370
      %431 = vmatpush1.msra.mxu0 %v369
      %432 = vmatprep.subr.mxu0 0.0
      %433 = vmatpush2.msra.mxu0 0.0
      %434 = vmatprep.subr.mxu0 0.0
      %435 = vmatpush2.msra.mxu0 0.0
      %436 = vmatprep.subr.mxu0 0.0
      %437 = vmatpush2.msra.mxu0 0.0
      %438 = vmatprep.subr.mxu0 0.0
      %439 = vmatpush2.msra.mxu0 0.0
      %440 = vmatprep.subr.mxu0 0.0
      %441 = vmatpush2.msra.mxu0 0.0
      %442 = vmatprep.subr.mxu0 0.0
      %443 = vmatpush2.msra.mxu0 0.0
      %444 = vmatprep.subr.mxu0 0.0
      %445 = vmatpush2.msra.mxu0 0.0
      %446 = vmatprep.subr.mxu0 0.0
      %447 = vmatpush2.msra.mxu0 0.0
      %448 = vmatprep.subr.mxu0 0.0
      %449 = vmatpush2.msra.mxu0 0.0
      %450 = vmatprep.subr.mxu0 0.0
      %451 = vmatpush2.msra.mxu0 0.0
      %452 = vmatprep.subr.mxu0 0.0
      %453 = vmatpush2.msra.mxu0 0.0
      %454 = vmatprep.subr.mxu0 0.0
      %455 = vmatpush2.msra.mxu0 0.0
      %456 = vmatprep.subr.mxu0 0.0
      %457 = vmatpush2.msra.mxu0 0.0
      %458 = vmatprep.subr.mxu0 0.0
      %459 = vmatpush2.msra.mxu0 0.0
      %460 = vmatprep.subr.mxu0 0.0
      %461 = vmatpush2.msra.mxu0 0.0
      %462 = vmatprep.subr.mxu0 0.0
      %463 = vmatpush2.msra.mxu0 0.0
      %464 = vmatprep.mubr.f32.mxu0 0.0
      %465 = vmatmul.mubr.f32.gmra.mxu0 %v398
      %v466 = vpop.f32.mrf.mxu0
      %v467 = vadd.f32 0.0, %v466
      %v468 = vpop.f32.mrf.mxu0
      %v469 = vadd.f32 0.0, %v468
      %470 = vdwg.mxu0
      %471 = vmatprep.subr.mxu0 0.0
      %472 = vmatpush1.msra.mxu0 0.0
      %473 = vmatprep.subr.mxu0 0.0
      %474 = vmatpush1.msra.mxu0 0.0
      %475 = vmatprep.subr.mxu0 0.0
      %476 = vmatpush1.msra.mxu0 0.0
      %477 = vmatprep.subr.mxu0 0.0
      %478 = vmatpush1.msra.mxu0 0.0
      %479 = vmatprep.subr.mxu0 0.0
      %480 = vmatpush1.msra.mxu0 0.0
      %481 = vmatprep.subr.mxu0 0.0
      %482 = vmatpush1.msra.mxu0 0.0
      %483 = vmatprep.subr.mxu0 0.0
      %484 = vmatpush1.msra.mxu0 0.0
      %485 = vmatprep.subr.mxu0 0.0
      %486 = vmatpush1.msra.mxu0 %v395
      %487 = vmatprep.subr.mxu0 0.0
      %488 = vmatpush1.msra.mxu0 %v392
      %489 = vmatprep.subr.mxu0 0.0
      %490 = vmatpush1.msra.mxu0 %v389
      %491 = vmatprep.subr.mxu0 0.0
      %492 = vmatpush1.msra.mxu0 %v386
      %493 = vmatprep.subr.mxu0 0.0
      %494 = vmatpush1.msra.mxu0 %v383
      %495 = vmatprep.subr.mxu0 0.0
      %496 = vmatpush1.msra.mxu0 %v380
      %497 = vmatprep.subr.mxu0 0.0
      %498 = vmatpush1.msra.mxu0 %v377
      %499 = vmatprep.subr.mxu0 0.0
      %500 = vmatpush1.msra.mxu0 %v374
      %501 = vmatprep.subr.mxu0 0.0
      %502 = vmatpush1.msra.mxu0 %v371
      %503 = vmatprep.subr.mxu0 0.0
      %504 = vmatpush2.msra.mxu0 0.0
      %505 = vmatprep.subr.mxu0 0.0
      %506 = vmatpush2.msra.mxu0 0.0
      %507 = vmatprep.subr.mxu0 0.0
      %508 = vmatpush2.msra.mxu0 0.0
      %509 = vmatprep.subr.mxu0 0.0
      %510 = vmatpush2.msra.mxu0 0.0
      %511 = vmatprep.subr.mxu0 0.0
      %512 = vmatpush2.msra.mxu0 0.0
      %513 = vmatprep.subr.mxu0 0.0
      %514 = vmatpush2.msra.mxu0 0.0
      %515 = vmatprep.subr.mxu0 0.0
      %516 = vmatpush2.msra.mxu0 0.0
      %517 = vmatprep.subr.mxu0 0.0
      %518 = vmatpush2.msra.mxu0 0.0
      %519 = vmatprep.subr.mxu0 0.0
      %520 = vmatpush2.msra.mxu0 0.0
      %521 = vmatprep.subr.mxu0 0.0
      %522 = vmatpush2.msra.mxu0 0.0
      %523 = vmatprep.subr.mxu0 0.0
      %524 = vmatpush2.msra.mxu0 0.0
      %525 = vmatprep.subr.mxu0 0.0
      %526 = vmatpush2.msra.mxu0 0.0
      %527 = vmatprep.subr.mxu0 0.0
      %528 = vmatpush2.msra.mxu0 0.0
      %529 = vmatprep.subr.mxu0 0.0
      %530 = vmatpush2.msra.mxu0 0.0
      %531 = vmatprep.subr.mxu0 0.0
      %532 = vmatpush2.msra.mxu0 0.0
      %533 = vmatprep.subr.mxu0 0.0
      %534 = vmatpush2.msra.mxu0 0.0
      %535 = vmatprep.mubr.f32.mxu0 0.0
      %536 = vmatmul.mubr.f32.gmra.mxu0 %v398
      %v537 = vpop.f32.mrf.mxu0
      %v538 = vadd.f32 0.0, %v537
      %v539 = vpop.f32.mrf.mxu0
      %540 = vdwg.mxu0
      %v541 = vld [vmem:[%s3] sm:$0x7]
      %v543 = vlaneseq
      %v544 = vshrl.u32 %v543, 7
      %v545 = vsub.s32 0, %v544
      %v546 = vrot.slane %v541, %v545
      %v547 = vlaneseq
      %v548 = vshrl.u32 %v547, 7
      %v549 = vsub.s32 1, %v548
      %v550 = vrot.slane %v541, %v549
      %v551 = vlaneseq
      %v552 = vshrl.u32 %v551, 7
      %v553 = vsub.s32 2, %v552
      %v554 = vrot.slane %v541, %v553
      %v558 = vmul.f32 %v467, %v546
      %v559 = vmul.f32 %v469, %v550
      %v560 = vmul.f32 %v538, %v554
      %561 = vst [vmem:[#allocation3] sm:$0xff] 0.0
      %562 = vst [vmem:[#allocation3 + $0x8] sm:$0xff] 0.0
      %563 = vst [vmem:[#allocation3 + $0x10] sm:$0xff] 0.0
      %564 = vst [vmem:[#allocation3 + $0x18] sm:$0xff] 0.0
      %vm565 = vcmask 130048
      %566 = vst.msk [vmem:[#allocation3 + $0x20] sm:$0xff] %vm565, 0.0
      %570 = vrot.lane.b32.xlu0 %v558, 72
      %v571 = vpop.permute.xlu0 %570
      %572 = vrot.lane.b32.xlu0 %v559, 72
      %v573 = vpop.permute.xlu0 %572
      %574 = vrot.lane.b32.xlu0 %v560, 72
      %v575 = vpop.permute.xlu0 %574
      %v576 = vsel %vm396, %v571, %v573
      %v577 = vsel %vm396, %v573, %v575
      %vm582 = vcmask 1044032
      %583 = vst.msk [vmem:[#allocation3] sm:$0xf] %vm582, %v571
      %584 = vst [vmem:[#allocation3 + $0x8] sm:$0xf] %v576
      %585 = vst [vmem:[#allocation3 + $0x10] sm:$0xf] %v577
      %vm586 = vcmask 584704
      %587 = vst.msk [vmem:[#allocation3 + $0x18] sm:$0xf] %vm586, %v575
      %v588 = vrot.slane %v558, 4
      %v589 = vrot.slane %v559, 4
      %v590 = vrot.slane %v560, 4
      %591 = vrot.lane.b32.xlu0 %v588, 71
      %v592 = vpop.permute.xlu0 %591
      %593 = vrot.lane.b32.xlu0 %v589, 71
      %v594 = vpop.permute.xlu0 %593
      %595 = vrot.lane.b32.xlu0 %v590, 71
      %v596 = vpop.permute.xlu0 %595
      %vm597 = vcmask 580608
      %v598 = vsel %vm597, %v592, %v594
      %v599 = vsel %vm597, %v594, %v596
      %vm604 = vcmask 1048124
      %605 = vst.msk [vmem:[#allocation3] sm:$0xf0] %vm604, %v592
      %606 = vst [vmem:[#allocation3 + $0x8] sm:$0xf0] %v598
      %607 = vst [vmem:[#allocation3 + $0x10] sm:$0xf0] %v599
      %vm608 = vcmask 580612
      %609 = vst.msk [vmem:[#allocation3 + $0x18] sm:$0xf0] %vm608, %v596
      %v610 = vld [vmem:[#allocation3] sm:$0xff]
      %v611 = vld [vmem:[#allocation3 + $0x8] sm:$0xff]
      %v612 = vld [vmem:[#allocation3 + $0x10] sm:$0xff]
      %v613 = vld [vmem:[#allocation3 + $0x18] sm:$0xff]
      %618 = vrot.lane.b32.xlu0 %v610, 106
      %v619 = vpop.permute.xlu0 %618
      %620 = vrot.lane.b32.xlu0 %v611, 106
      %v621 = vpop.permute.xlu0 %620
      %622 = vrot.lane.b32.xlu0 %v612, 106
      %v623 = vpop.permute.xlu0 %622
      %624 = vrot.lane.b32.xlu0 %v613, 106
      %v625 = vpop.permute.xlu0 %624
      %vm626 = vcmask 867328
      %v627 = vsel %vm626, %v619, %v621
      %v628 = vsel %vm626, %v621, %v623
      %v629 = vsel %vm626, %v623, %v625
      %633 = vst [vmem:[#allocation2] sm:$0xff] %v627
      %634 = vst [vmem:[#allocation2 + $0x8] sm:$0xff] %v628
      %635 = vst [vmem:[#allocation2 + $0x10] sm:$0xff] %v629
      %636 = vrot.lane.b32.xlu0 %v610, 104
      %v637 = vpop.permute.xlu0 %636
      %638 = vrot.lane.b32.xlu0 %v611, 104
      %v639 = vpop.permute.xlu0 %638
      %640 = vrot.lane.b32.xlu0 %v612, 104
      %v641 = vpop.permute.xlu0 %640
      %642 = vrot.lane.b32.xlu0 %v613, 104
      %v643 = vpop.permute.xlu0 %642
      %vm644 = vcmask 850944
      %v645 = vsel %vm644, %v637, %v639
      %v646 = vsel %vm644, %v639, %v641
      %v647 = vsel %vm644, %v641, %v643
      %651 = vst [vmem:[#allocation2 + $0x18] sm:$0xff] %v645
      %652 = vst [vmem:[#allocation2 + $0x20] sm:$0xff] %v646
      %653 = vst [vmem:[#allocation2 + $0x28] sm:$0xff] %v647
      %654 = vrot.lane.b32.xlu0 %v610, 102
      %v655 = vpop.permute.xlu0 %654
      %656 = vrot.lane.b32.xlu0 %v611, 102
      %v657 = vpop.permute.xlu0 %656
      %658 = vrot.lane.b32.xlu0 %v612, 102
      %v659 = vpop.permute.xlu0 %658
      %660 = vrot.lane.b32.xlu0 %v613, 102
      %v661 = vpop.permute.xlu0 %660
      %vm662 = vcmask 834560
      %v663 = vsel %vm662, %v655, %v657
      %v664 = vsel %vm662, %v657, %v659
      %v665 = vsel %vm662, %v659, %v661
      %669 = vst [vmem:[#allocation2 + $0x30] sm:$0xff] %v663
      %670 = vst [vmem:[#allocation2 + $0x38] sm:$0xff] %v664
      %671 = vst [vmem:[#allocation2 + $0x40] sm:$0xff] %v665
      %672 = vrot.lane.b32.xlu0 %v610, 82
      %v673 = vpop.permute.xlu0 %672
      %674 = vrot.lane.b32.xlu0 %v611, 82
      %v675 = vpop.permute.xlu0 %674
      %676 = vrot.lane.b32.xlu0 %v612, 82
      %v677 = vpop.permute.xlu0 %676
      %678 = vrot.lane.b32.xlu0 %v613, 82
      %v679 = vpop.permute.xlu0 %678
      %vm680 = vcmask 670720
      %v681 = vsel %vm680, %v673, %v675
      %v682 = vsel %vm680, %v675, %v677
      %v683 = vsel %vm680, %v677, %v679
      %687 = vst [vmem:[#allocation2 + $0x48] sm:$0xff] %v681
      %688 = vst [vmem:[#allocation2 + $0x50] sm:$0xff] %v682
      %689 = vst [vmem:[#allocation2 + $0x58] sm:$0xff] %v683
      %690 = vrot.lane.b32.xlu0 %v610, 80
      %v691 = vpop.permute.xlu0 %690
      %692 = vrot.lane.b32.xlu0 %v611, 80
      %v693 = vpop.permute.xlu0 %692
      %694 = vrot.lane.b32.xlu0 %v612, 80
      %v695 = vpop.permute.xlu0 %694
      %696 = vrot.lane.b32.xlu0 %v613, 80
      %v697 = vpop.permute.xlu0 %696
      %v698 = vsel %vm232, %v691, %v693
      %v699 = vsel %vm232, %v693, %v695
      %v700 = vsel %vm232, %v695, %v697
      %704 = vst [vmem:[#allocation2 + $0x60] sm:$0xff] %v698
      %705 = vst [vmem:[#allocation2 + $0x68] sm:$0xff] %v699
      %706 = vst [vmem:[#allocation2 + $0x70] sm:$0xff] %v700
      %707 = vrot.lane.b32.xlu0 %v610, 78
      %v708 = vpop.permute.xlu0 %707
      %709 = vrot.lane.b32.xlu0 %v611, 78
      %v710 = vpop.permute.xlu0 %709
      %711 = vrot.lane.b32.xlu0 %v612, 78
      %v712 = vpop.permute.xlu0 %711
      %713 = vrot.lane.b32.xlu0 %v613, 78
      %v714 = vpop.permute.xlu0 %713
      %vm715 = vcmask 637952
      %v716 = vsel %vm715, %v708, %v710
      %v717 = vsel %vm715, %v710, %v712
      %v718 = vsel %vm715, %v712, %v714
      %722 = vst [vmem:[#allocation2 + $0x78] sm:$0xff] %v716
      %723 = vst [vmem:[#allocation2 + $0x80] sm:$0xff] %v717
      %724 = vst [vmem:[#allocation2 + $0x88] sm:$0xff] %v718
      %725 = vrot.lane.b32.xlu0 %v610, 58
      %v726 = vpop.permute.xlu0 %725
      %727 = vrot.lane.b32.xlu0 %v611, 58
      %v728 = vpop.permute.xlu0 %727
      %729 = vrot.lane.b32.xlu0 %v612, 58
      %v730 = vpop.permute.xlu0 %729
      %731 = vrot.lane.b32.xlu0 %v613, 58
      %v732 = vpop.permute.xlu0 %731
      %vm733 = vcmask 474112
      %v734 = vsel %vm733, %v726, %v728
      %v735 = vsel %vm733, %v728, %v730
      %v736 = vsel %vm733, %v730, %v732
      %740 = vst [vmem:[#allocation2 + $0x90] sm:$0xff] %v734
      %741 = vst [vmem:[#allocation2 + $0x98] sm:$0xff] %v735
      %742 = vst [vmem:[#allocation2 + $0xa0] sm:$0xff] %v736
      %743 = vrot.lane.b32.xlu0 %v610, 56
      %v744 = vpop.permute.xlu0 %743
      %745 = vrot.lane.b32.xlu0 %v611, 56
      %v746 = vpop.permute.xlu0 %745
      %747 = vrot.lane.b32.xlu0 %v612, 56
      %v748 = vpop.permute.xlu0 %747
      %749 = vrot.lane.b32.xlu0 %v613, 56
      %v750 = vpop.permute.xlu0 %749
      %v751 = vsel %vm286, %v744, %v746
      %v752 = vsel %vm286, %v746, %v748
      %v753 = vsel %vm286, %v748, %v750
      %757 = vst [vmem:[#allocation2 + $0xa8] sm:$0xff] %v751
      %758 = vst [vmem:[#allocation2 + $0xb0] sm:$0xff] %v752
      %759 = vst [vmem:[#allocation2 + $0xb8] sm:$0xff] %v753
      %760 = vrot.lane.b32.xlu0 %v610, 54
      %v761 = vpop.permute.xlu0 %760
      %762 = vrot.lane.b32.xlu0 %v611, 54
      %v763 = vpop.permute.xlu0 %762
      %764 = vrot.lane.b32.xlu0 %v612, 54
      %v765 = vpop.permute.xlu0 %764
      %766 = vrot.lane.b32.xlu0 %v613, 54
      %v767 = vpop.permute.xlu0 %766
      %vm768 = vcmask 441344
      %v769 = vsel %vm768, %v761, %v763
      %v770 = vsel %vm768, %v763, %v765
      %v771 = vsel %vm768, %v765, %v767
      %775 = vst [vmem:[#allocation2 + $0xc0] sm:$0xff] %v769
      %776 = vst [vmem:[#allocation2 + $0xc8] sm:$0xff] %v770
      %777 = vst [vmem:[#allocation2 + $0xd0] sm:$0xff] %v771
      %778 = vrot.lane.b32.xlu0 %v610, 34
      %v779 = vpop.permute.xlu0 %778
      %780 = vrot.lane.b32.xlu0 %v611, 34
      %v781 = vpop.permute.xlu0 %780
      %782 = vrot.lane.b32.xlu0 %v612, 34
      %v783 = vpop.permute.xlu0 %782
      %784 = vrot.lane.b32.xlu0 %v613, 34
      %v785 = vpop.permute.xlu0 %784
      %vm786 = vcmask 277504
      %v787 = vsel %vm786, %v779, %v781
      %v788 = vsel %vm786, %v781, %v783
      %v789 = vsel %vm786, %v783, %v785
      %793 = vst [vmem:[#allocation2 + $0xd8] sm:$0xff] %v787
      %794 = vst [vmem:[#allocation2 + $0xe0] sm:$0xff] %v788
      %795 = vst [vmem:[#allocation2 + $0xe8] sm:$0xff] %v789
      %796 = vrot.lane.b32.xlu0 %v610, 32
      %v797 = vpop.permute.xlu0 %796
      %798 = vrot.lane.b32.xlu0 %v611, 32
      %v799 = vpop.permute.xlu0 %798
      %800 = vrot.lane.b32.xlu0 %v612, 32
      %v801 = vpop.permute.xlu0 %800
      %802 = vrot.lane.b32.xlu0 %v613, 32
      %v803 = vpop.permute.xlu0 %802
      %v804 = vsel %vm340, %v797, %v799
      %v805 = vsel %vm340, %v799, %v801
      %v806 = vsel %vm340, %v801, %v803
      %810 = vst [vmem:[#allocation2 + $0xf0] sm:$0xff] %v804
      %811 = vst [vmem:[#allocation2 + $0xf8] sm:$0xff] %v805
      %812 = vst [vmem:[#allocation2 + $0x100] sm:$0xff] %v806
      %813 = vrot.lane.b32.xlu0 %v610, 30
      %v814 = vpop.permute.xlu0 %813
      %815 = vrot.lane.b32.xlu0 %v611, 30
      %v816 = vpop.permute.xlu0 %815
      %817 = vrot.lane.b32.xlu0 %v612, 30
      %v818 = vpop.permute.xlu0 %817
      %819 = vrot.lane.b32.xlu0 %v613, 30
      %v820 = vpop.permute.xlu0 %819
      %vm821 = vcmask 244736
      %v822 = vsel %vm821, %v814, %v816
      %v823 = vsel %vm821, %v816, %v818
      %v824 = vsel %vm821, %v818, %v820
      %828 = vst [vmem:[#allocation2 + $0x108] sm:$0xff] %v822
      %829 = vst [vmem:[#allocation2 + $0x110] sm:$0xff] %v823
      %830 = vst [vmem:[#allocation2 + $0x118] sm:$0xff] %v824
      %831 = vrot.lane.b32.xlu0 %v610, 10
      %v832 = vpop.permute.xlu0 %831
      %833 = vrot.lane.b32.xlu0 %v611, 10
      %v834 = vpop.permute.xlu0 %833
      %835 = vrot.lane.b32.xlu0 %v612, 10
      %v836 = vpop.permute.xlu0 %835
      %837 = vrot.lane.b32.xlu0 %v613, 10
      %v838 = vpop.permute.xlu0 %837
      %vm839 = vcmask 80896
      %v840 = vsel %vm839, %v832, %v834
      %v841 = vsel %vm839, %v834, %v836
      %v842 = vsel %vm839, %v836, %v838
      %846 = vst [vmem:[#allocation2 + $0x120] sm:$0xff] %v840
      %847 = vst [vmem:[#allocation2 + $0x128] sm:$0xff] %v841
      %848 = vst [vmem:[#allocation2 + $0x130] sm:$0xff] %v842
      %849 = vrot.lane.b32.xlu0 %v610, 8
      %v850 = vpop.permute.xlu0 %849
      %851 = vrot.lane.b32.xlu0 %v611, 8
      %v852 = vpop.permute.xlu0 %851
      %853 = vrot.lane.b32.xlu0 %v612, 8
      %v854 = vpop.permute.xlu0 %853
      %855 = vrot.lane.b32.xlu0 %v613, 8
      %v856 = vpop.permute.xlu0 %855
      %vm857 = vcmask 64512
      %v858 = vsel %vm857, %v850, %v852
      %v859 = vsel %vm857, %v852, %v854
      %v860 = vsel %vm857, %v854, %v856
      %864 = vst [vmem:[#allocation2 + $0x138] sm:$0xff] %v858
      %865 = vst [vmem:[#allocation2 + $0x140] sm:$0xff] %v859
      %866 = vst [vmem:[#allocation2 + $0x148] sm:$0xff] %v860
      %867 = vrot.lane.b32.xlu0 %v610, 6
      %v868 = vpop.permute.xlu0 %867
      %869 = vrot.lane.b32.xlu0 %v611, 6
      %v870 = vpop.permute.xlu0 %869
      %871 = vrot.lane.b32.xlu0 %v612, 6
      %v872 = vpop.permute.xlu0 %871
      %873 = vrot.lane.b32.xlu0 %v613, 6
      %v874 = vpop.permute.xlu0 %873
      %vm875 = vcmask 48128
      %v876 = vsel %vm875, %v868, %v870
      %v877 = vsel %vm875, %v870, %v872
      %v878 = vsel %vm875, %v872, %v874
      %882 = vst [vmem:[#allocation2 + $0x150] sm:$0xff] %v876
      %883 = vst [vmem:[#allocation2 + $0x158] sm:$0xff] %v877
      %884 = vst [vmem:[#allocation2 + $0x160] sm:$0xff] %v878
      %v885 = vld [vmem:[%s2] sm:$0xf]
      %v886 = vld [vmem:[#allocation2] sm:$0xff]
      %v887 = vld [vmem:[#allocation2 + $0x8] sm:$0xff]
      %v888 = vld [vmem:[#allocation2 + $0x10] sm:$0xff]
      %v889 = vld [vmem:[#allocation2 + $0x18] sm:$0xff]
      %v890 = vld [vmem:[#allocation2 + $0x20] sm:$0xff]
      %v891 = vld [vmem:[#allocation2 + $0x28] sm:$0xff]
      %v892 = vld [vmem:[#allocation2 + $0x30] sm:$0xff]
      %v893 = vld [vmem:[#allocation2 + $0x38] sm:$0xff]
      %v894 = vld [vmem:[#allocation2 + $0x40] sm:$0xff]
      %v895 = vld [vmem:[#allocation2 + $0x48] sm:$0xff]
      %v896 = vld [vmem:[#allocation2 + $0x50] sm:$0xff]
      %v897 = vld [vmem:[#allocation2 + $0x58] sm:$0xff]
      %v898 = vld [vmem:[#allocation2 + $0x60] sm:$0xff]
      %v899 = vld [vmem:[#allocation2 + $0x68] sm:$0xff]
      %v900 = vld [vmem:[#allocation2 + $0x70] sm:$0xff]
      %v901 = vld [vmem:[#allocation2 + $0x78] sm:$0xff]
      %v902 = vld [vmem:[#allocation2 + $0x80] sm:$0xff]
      %v903 = vld [vmem:[#allocation2 + $0x88] sm:$0xff]
      %v904 = vld [vmem:[#allocation2 + $0x90] sm:$0xff]
      %v905 = vld [vmem:[#allocation2 + $0x98] sm:$0xff]
      %v906 = vld [vmem:[#allocation2 + $0xa0] sm:$0xff]
      %v907 = vld [vmem:[#allocation2 + $0xa8] sm:$0xff]
      %v908 = vld [vmem:[#allocation2 + $0xb0] sm:$0xff]
      %v909 = vld [vmem:[#allocation2 + $0xb8] sm:$0xff]
      %v910 = vld [vmem:[#allocation2 + $0xc0] sm:$0xff]
      %v911 = vld [vmem:[#allocation2 + $0xc8] sm:$0xff]
      %v912 = vld [vmem:[#allocation2 + $0xd0] sm:$0xff]
      %v913 = vld [vmem:[#allocation2 + $0xd8] sm:$0xff]
      %v914 = vld [vmem:[#allocation2 + $0xe0] sm:$0xff]
      %v915 = vld [vmem:[#allocation2 + $0xe8] sm:$0xff]
      %v916 = vld [vmem:[#allocation2 + $0xf0] sm:$0xff]
      %v917 = vld [vmem:[#allocation2 + $0xf8] sm:$0xff]
      %v918 = vld [vmem:[#allocation2 + $0x100] sm:$0xff]
      %v919 = vld [vmem:[#allocation2 + $0x108] sm:$0xff]
      %v920 = vld [vmem:[#allocation2 + $0x110] sm:$0xff]
      %v921 = vld [vmem:[#allocation2 + $0x118] sm:$0xff]
      %v922 = vld [vmem:[#allocation2 + $0x120] sm:$0xff]
      %v923 = vld [vmem:[#allocation2 + $0x128] sm:$0xff]
      %v924 = vld [vmem:[#allocation2 + $0x130] sm:$0xff]
      %v925 = vld [vmem:[#allocation2 + $0x138] sm:$0xff]
      %v926 = vld [vmem:[#allocation2 + $0x140] sm:$0xff]
      %v927 = vld [vmem:[#allocation2 + $0x148] sm:$0xff]
      %v928 = vld [vmem:[#allocation2 + $0x150] sm:$0xff]
      %v929 = vld [vmem:[#allocation2 + $0x158] sm:$0xff]
      %v930 = vld [vmem:[#allocation2 + $0x160] sm:$0xff]
      %vm931 = vcmask 982016
      %v933 = vsel %vm931, %v885, 0
      %935 = vmatprep.subr.mxu0 0.0
      %936 = vmatpush1.msra.mxu0 0.0
      %937 = vmatprep.subr.mxu0 %v929
      %938 = vmatpush1.msra.mxu0 %v928
      %939 = vmatprep.subr.mxu0 %v926
      %940 = vmatpush1.msra.mxu0 %v925
      %941 = vmatprep.subr.mxu0 %v923
      %942 = vmatpush1.msra.mxu0 %v922
      %943 = vmatprep.subr.mxu0 %v920
      %944 = vmatpush1.msra.mxu0 %v919
      %945 = vmatprep.subr.mxu0 %v917
      %946 = vmatpush1.msra.mxu0 %v916
      %947 = vmatprep.subr.mxu0 %v914
      %948 = vmatpush1.msra.mxu0 %v913
      %949 = vmatprep.subr.mxu0 %v911
      %950 = vmatpush1.msra.mxu0 %v910
      %951 = vmatprep.subr.mxu0 %v908
      %952 = vmatpush1.msra.mxu0 %v907
      %953 = vmatprep.subr.mxu0 %v905
      %954 = vmatpush1.msra.mxu0 %v904
      %955 = vmatprep.subr.mxu0 %v902
      %956 = vmatpush1.msra.mxu0 %v901
      %957 = vmatprep.subr.mxu0 %v899
      %958 = vmatpush1.msra.mxu0 %v898
      %959 = vmatprep.subr.mxu0 %v896
      %960 = vmatpush1.msra.mxu0 %v895
      %961 = vmatprep.subr.mxu0 %v893
      %962 = vmatpush1.msra.mxu0 %v892
      %963 = vmatprep.subr.mxu0 %v890
      %964 = vmatpush1.msra.mxu0 %v889
      %965 = vmatprep.subr.mxu0 %v887
      %966 = vmatpush1.msra.mxu0 %v886
      %967 = vmatprep.subr.mxu0 0.0
      %968 = vmatpush2.msra.mxu0 0.0
      %969 = vmatprep.subr.mxu0 0.0
      %970 = vmatpush2.msra.mxu0 0.0
      %971 = vmatprep.subr.mxu0 0.0
      %972 = vmatpush2.msra.mxu0 0.0
      %973 = vmatprep.subr.mxu0 0.0
      %974 = vmatpush2.msra.mxu0 0.0
      %975 = vmatprep.subr.mxu0 0.0
      %976 = vmatpush2.msra.mxu0 0.0
      %977 = vmatprep.subr.mxu0 0.0
      %978 = vmatpush2.msra.mxu0 0.0
      %979 = vmatprep.subr.mxu0 0.0
      %980 = vmatpush2.msra.mxu0 0.0
      %981 = vmatprep.subr.mxu0 0.0
      %982 = vmatpush2.msra.mxu0 0.0
      %983 = vmatprep.subr.mxu0 0.0
      %984 = vmatpush2.msra.mxu0 0.0
      %985 = vmatprep.subr.mxu0 0.0
      %986 = vmatpush2.msra.mxu0 0.0
      %987 = vmatprep.subr.mxu0 0.0
      %988 = vmatpush2.msra.mxu0 0.0
      %989 = vmatprep.subr.mxu0 0.0
      %990 = vmatpush2.msra.mxu0 0.0
      %991 = vmatprep.subr.mxu0 0.0
      %992 = vmatpush2.msra.mxu0 0.0
      %993 = vmatprep.subr.mxu0 0.0
      %994 = vmatpush2.msra.mxu0 0.0
      %995 = vmatprep.subr.mxu0 0.0
      %996 = vmatpush2.msra.mxu0 0.0
      %997 = vmatprep.subr.mxu0 0.0
      %998 = vmatpush2.msra.mxu0 0.0
      %999 = vmatprep.mubr.f32.mxu0 0.0
      %1000 = vmatmul.mubr.f32.gmra.mxu0 %v933
      %v1001 = vpop.f32.mrf.mxu0
      %v1002 = vadd.f32 0.0, %v1001
      %v1003 = vpop.f32.mrf.mxu0
      %v1004 = vadd.f32 0.0, %v1003
      %1005 = vdwg.mxu0
      %1006 = vmatprep.subr.mxu0 0.0
      %1007 = vmatpush1.msra.mxu0 0.0
      %1008 = vmatprep.subr.mxu0 0.0
      %1009 = vmatpush1.msra.mxu0 %v930
      %1010 = vmatprep.subr.mxu0 0.0
      %1011 = vmatpush1.msra.mxu0 %v927
      %1012 = vmatprep.subr.mxu0 0.0
      %1013 = vmatpush1.msra.mxu0 %v924
      %1014 = vmatprep.subr.mxu0 0.0
      %1015 = vmatpush1.msra.mxu0 %v921
      %1016 = vmatprep.subr.mxu0 0.0
      %1017 = vmatpush1.msra.mxu0 %v918
      %1018 = vmatprep.subr.mxu0 0.0
      %1019 = vmatpush1.msra.mxu0 %v915
      %1020 = vmatprep.subr.mxu0 0.0
      %1021 = vmatpush1.msra.mxu0 %v912
      %1022 = vmatprep.subr.mxu0 0.0
      %1023 = vmatpush1.msra.mxu0 %v909
      %1024 = vmatprep.subr.mxu0 0.0
      %1025 = vmatpush1.msra.mxu0 %v906
      %1026 = vmatprep.subr.mxu0 0.0
      %1027 = vmatpush1.msra.mxu0 %v903
      %1028 = vmatprep.subr.mxu0 0.0
      %1029 = vmatpush1.msra.mxu0 %v900
      %1030 = vmatprep.subr.mxu0 0.0
      %1031 = vmatpush1.msra.mxu0 %v897
      %1032 = vmatprep.subr.mxu0 0.0
      %1033 = vmatpush1.msra.mxu0 %v894
      %1034 = vmatprep.subr.mxu0 0.0
      %1035 = vmatpush1.msra.mxu0 %v891
      %1036 = vmatprep.subr.mxu0 0.0
      %1037 = vmatpush1.msra.mxu0 %v888
      %1038 = vmatprep.subr.mxu0 0.0
      %1039 = vmatpush2.msra.mxu0 0.0
      %1040 = vmatprep.subr.mxu0 0.0
      %1041 = vmatpush2.msra.mxu0 0.0
      %1042 = vmatprep.subr.mxu0 0.0
      %1043 = vmatpush2.msra.mxu0 0.0
      %1044 = vmatprep.subr.mxu0 0.0
      %1045 = vmatpush2.msra.mxu0 0.0
      %1046 = vmatprep.subr.mxu0 0.0
      %1047 = vmatpush2.msra.mxu0 0.0
      %1048 = vmatprep.subr.mxu0 0.0
      %1049 = vmatpush2.msra.mxu0 0.0
      %1050 = vmatprep.subr.mxu0 0.0
      %1051 = vmatpush2.msra.mxu0 0.0
      %1052 = vmatprep.subr.mxu0 0.0
      %1053 = vmatpush2.msra.mxu0 0.0
      %1054 = vmatprep.subr.mxu0 0.0
      %1055 = vmatpush2.msra.mxu0 0.0
      %1056 = vmatprep.subr.mxu0 0.0
      %1057 = vmatpush2.msra.mxu0 0.0
      %1058 = vmatprep.subr.mxu0 0.0
      %1059 = vmatpush2.msra.mxu0 0.0
      %1060 = vmatprep.subr.mxu0 0.0
      %1061 = vmatpush2.msra.mxu0 0.0
      %1062 = vmatprep.subr.mxu0 0.0
      %1063 = vmatpush2.msra.mxu0 0.0
      %1064 = vmatprep.subr.mxu0 0.0
      %1065 = vmatpush2.msra.mxu0 0.0
      %1066 = vmatprep.subr.mxu0 0.0
      %1067 = vmatpush2.msra.mxu0 0.0
      %1068 = vmatprep.subr.mxu0 0.0
      %1069 = vmatpush2.msra.mxu0 0.0
      %1070 = vmatprep.mubr.f32.mxu0 0.0
      %1071 = vmatmul.mubr.f32.gmra.mxu0 %v933
      %v1072 = vpop.f32.mrf.mxu0
      %v1073 = vadd.f32 0.0, %v1072
      %v1074 = vpop.f32.mrf.mxu0
      %1075 = vdwg.mxu0
      %v1076 = vxor.u32 %v1002, 2147483648
      %v1077 = vxor.u32 %v1004, 2147483648
      %v1078 = vxor.u32 %v1073, 2147483648
      %v1079 = vmul.f32 %v1076, 1.442695
      %v1080 = vpow.pop %v1079
      %v1081 = vmul.f32 %v1077, 1.442695
      %v1082 = vpow.pop %v1081
      %v1083 = vmul.f32 %v1078, 1.442695
      %v1084 = vpow.pop %v1083
      %v1085 = vadd.f32 %v1080, 1.0
      %v1086 = vadd.f32 %v1082, 1.0
      %v1087 = vadd.f32 %v1084, 1.0
      %v1088 = vrcp.pop %v1085
      %v1089 = vmul.f32 1.0, %v1088
      %v1090 = vrcp.pop %v1086
      %v1091 = vmul.f32 1.0, %v1090
      %v1092 = vrcp.pop %v1087
      %v1093 = vmul.f32 1.0, %v1092
      %1097 = vrot.lane.b32.xlu0 %v1089, 72
      %v1098 = vpop.permute.xlu0 %1097
      %1099 = vrot.lane.b32.xlu0 %v1091, 72
      %v1100 = vpop.permute.xlu0 %1099
      %1101 = vrot.lane.b32.xlu0 %v1093, 72
      %v1102 = vpop.permute.xlu0 %1101
      %v1103 = vsel %vm396, %v1098, %v1100
      %v1104 = vsel %vm396, %v1100, %v1102
      %v1109 = vmul.f32 %v198, %v1098
      %v1110 = vmul.f32 %v199, %v1103
      %v1111 = vmul.f32 %v200, %v1104
      %v1112 = vmul.f32 %v201, %v1102
      %v1117 = vcombine.low %v1109, %v1110
      %v1118 = vcombine.low %v1111, %v1112
      %1119 = vrot.lane.b32.xlu0 %v1117, 56
      %v1120 = vpop.permute.xlu0 %1119
      %1121 = vrot.lane.b32.xlu0 %v1118, 56
      %v1122 = vpop.permute.xlu0 %1121
      %v1123 = vrot.slane %v1120, 4
      %v1124 = vrot.slane %v1122, 4
      %vm1125 = vcmask 1043456
      %v1126 = vsel %vm1125, %v1123, %v1124
      %v1127 = vsel %vm286, %v1120, %v1126
      %v1128 = vsel %vm286, %v1122, %v1124
      %1131 = vst [vmem:[%s197] sm:$0xff] %v1127
      %1132 = vst [vmem:[%s197 + $0x8] sm:$0xf] %v1128
      %p1133 = scmp.lt.s32.totalorder %s15, 1
      %s1134 = scalar_select %p1133, %s15, 1
      %s1135 = smul.addr %s1134, 3
      %s1136 = smul.addr %s1135, 4
      %s1137 = scalar_lea.vmem %s4, %s1136
      // Predicated region
      $region37: #{fagc_pallas.1} parent=35 // pred_check
        %p1138 = pneg %p122
      $region38: #{fagc_pallas.1} parent=35 // pred_check_branch
        %1140 = sbr.rel (%p1138) target = $region40
      $region39: #{fagc_pallas.1} parent=35 // pred_region
        _
      $region40: #{fagc_pallas.1} parent=35 // pred_fallthru
        _
    $region36: #{fagc_pallas.1} parent=5 // pred_fallthru
      _
    %p1141 = scmp.le.s32.totalorder 2, %s10
    // Predicated region
    $region41: #{fagc_pallas.1} parent=5 // pred_check
      %p1142 = pneg %p1141
    $region42: #{fagc_pallas.1} parent=5 // pred_check_branch
      %1144 = sbr.rel (%p1142) target = $region44
    $region43: #{fagc_pallas.1} parent=5 // pred_region
      %s1145 = ssub.s32 %s10, 2
      // Predicated region
      $region45: #{fagc_pallas.1} parent=43 // pred_check
        %p1146 = pneg %p128
      $region46: #{fagc_pallas.1} parent=43 // pred_check_branch
        %1148 = sbr.rel (%p1146) target = $region48
      $region47: #{fagc_pallas.1} parent=43 // pred_region
        %p1149 = scmp.lt.s32.totalorder %s16, 1
        %s1150 = scalar_select %p1149, %s16, 1
        %s1151 = smul.addr %s1150, 3
        %s1152 = smul.addr %s1151, 4
        %s1153 = scalar_lea.vmem %s4, %s1152
      $region48: #{fagc_pallas.1} parent=43 // pred_fallthru
        _
    $region44: #{fagc_pallas.1} parent=5 // pred_fallthru
      _
  $region6: #{fagc_pallas.1} parent=0 // loop_footer
    %s14 = sadd.s32 1, %s10
  $region7: #{fagc_pallas.1} parent=0 // loop_footer_branch
    %9 = sbr.rel target = $region3
  $region8: #{fagc_pallas.1} parent=0 // loop_exit
    _

</llo_original>
